<compile_context>
chip_gen: v7x
topology: tpu7x:2x2x1
jax: 0.10.0
libtpu: 0.0.40
codegen_flags: <defaults>
</compile_context>

<pallas_src>
import math

import numpy as np

import jax
import jax.numpy as jnp
from jax.experimental import pallas as pl
from jax.experimental.pallas import tpu as pltpu

BN_EPS = 1e-5
LANE = 128
NON_CENTER_TAPS = (0, 1, 2, 3, 5, 6, 7, 8)   # tap t = kh*3 + kw, center (1,1) -> t = 4 skipped


# --------------------------- host-built constant operands --------------------------- #

def _make_tap_masks(nb, h, w):
    """(8, 1, nb*h*w) float masks implementing the zero padding of a 3x3, pad=1 conv.

    Activation layout is (C, M) with M = nb*h*w flattened row-major over (image, row, col).
    Row j corresponds to NON_CENTER_TAPS[j]; the all-ones center-tap mask is omitted.
    """
    m = nb * h * w
    msk = np.zeros((8, 1, m), np.float32)
    j = 0
    for kh in range(3):
        for kw in range(3):
            if kh == 1 and kw == 1:
                continue
            dh, dw = kh - 1, kw - 1
            for nn in range(nb):
                for hh in range(h):
                    for ww in range(w):
                        if 0 <= hh + dh < h and 0 <= ww + dw < w:
                            msk[j, 0, nn * h * w + hh * w + ww] = 1.0
            j += 1
    return jnp.asarray(msk)


def _make_decimation(nb, h, w):
    """(nb*h*w, nb*h//2*w//2) 0/1 matrix selecting the even (stride-2) spatial positions."""
    ho, wo = h // 2, w // 2
    d = np.zeros((nb * h * w, nb * ho * wo), np.float32)
    for nn in range(nb):
        for hh in range(ho):
            for ww in range(wo):
                d[nn * h * w + (2 * hh) * w + 2 * ww, nn * ho * wo + hh * wo + ww] = 1.0
    return jnp.asarray(d)


def _make_pool_t(nb, h, w):
    """(nb, nb*h*w) matrix implementing AdaptiveAvgPool2d(1) per image (transposed layout)."""
    p = np.zeros((nb, nb * h * w), np.float32)
    inv = 1.0 / float(h * w)
    for nn in range(nb):
        p[nn, nn * h * w:(nn + 1) * h * w] = inv
    return jnp.asarray(p)


def _roll_shift_sign():
    """Probe pltpu.roll's shift convention with a tiny kernel.

    Returns sign s such that pltpu.roll(x, (s*d) % M, axis=1)[..., m] == x[..., (m + d) % M].
    """
    def probe(x_ref, o_ref):
        o_ref[...] = pltpu.roll(x_ref[...], 1, axis=1)

    x = jnp.tile(jnp.arange(LANE, dtype=jnp.float32)[None, :], (8, 1))
    y = pl.pallas_call(probe, out_shape=jax.ShapeDtypeStruct((8, LANE), jnp.float32))(x)
    first = float(jax.device_get(y[0, 0]))
    # jnp.roll convention: out[i] = x[i - shift]  ->  out[0] == LANE - 1  -> sign = -1.
    return 1 if abs(first - 1.0) < 0.5 else -1


# ----------------------------- deterministic parameters ----------------------------- #

def _kaiming_hwio(key, kh, kw, cin, cout):
    # kaiming_normal_(nonlinearity='relu') on a (cout, cin, kh, kw) conv weight.
    std = math.sqrt(2.0 / (cin * kh * kw))
    return jax.random.normal(key, (kh, kw, cin, cout), jnp.float32) * std


def _fold_bn(w_hwio, planes):
    # eval-mode BatchNorm with the module's init: gamma=1, beta=0, running_mean=0, running_var=1.
    gamma = jnp.ones((planes,), jnp.float32)
    beta = jnp.zeros((planes,), jnp.float32)
    mean = jnp.zeros((planes,), jnp.float32)
    var = jnp.ones((planes,), jnp.float32)
    scale = gamma / jnp.sqrt(var + BN_EPS)
    return w_hwio * scale[None, None, None, :], beta - mean * scale


def init_params(key, n_size=1, num_classes=10):
    keys = jax.random.split(key, 4)
    w, b = _fold_bn(_kaiming_hwio(keys[0], 3, 3, 3, 16), 16)
    params = {"stem": {"w": w, "b": b}, "blocks": []}
    inplanes, kidx = 16, 0
    for planes, stride in ((16, 1), (32, 2), (64, 2)):      # layer1, layer2, layer3
        for i in range(n_size):
            bkey = jax.random.fold_in(keys[1], kidx)
            kidx += 1
            k1, k2, k3 = jax.random.split(bkey, 3)
            s = stride if i == 0 else 1
            w1, b1 = _fold_bn(_kaiming_hwio(k1, 3, 3, inplanes, planes), planes)
            w2, b2 = _fold_bn(_kaiming_hwio(k2, 3, 3, planes, planes), planes)
            blk = {"stride": s, "w1": w1, "b1": b1, "w2": w2, "b2": b2}
            if s != 1 or inplanes != planes:
                wd, bd = _fold_bn(_kaiming_hwio(k3, 1, 1, inplanes, planes), planes)
                blk["wd"], blk["bd"] = wd, bd
            params["blocks"].append(blk)
            inplanes = planes
    # nn.Linear(64, num_classes) default init: U(-1/sqrt(64), 1/sqrt(64)).
    bound = 1.0 / math.sqrt(64.0)
    params["fc_w"] = jax.random.uniform(keys[2], (num_classes, 64), jnp.float32, -bound, bound)
    params["fc_b"] = jax.random.uniform(keys[3], (num_classes,), jnp.float32, -bound, bound)
    return params


# ------------------------------- fused Pallas forward -------------------------------- #

def _stack_taps(w_hwio, cin_pad=None):
    # (3, 3, cin, cout) -> (cout, 9*cin_pad) bf16, column block t*cin..(t+1)*cin for tap t.
    kh, kw, ci, co = w_hwio.shape
    if cin_pad is not None and cin_pad > ci:
        w_hwio = jnp.pad(w_hwio, ((0, 0), (0, 0), (0, cin_pad - ci), (0, 0)))
        ci = cin_pad
    return jnp.transpose(w_hwio, (3, 0, 1, 2)).reshape(co, kh * kw * ci).astype(jnp.bfloat16)


def build_forward(params, n, h, w, roll_sign, nb=8):
    assert n % nb == 0, "batch must be a multiple of the per-step image count"
    assert nb % 8 == 0, "nb must be a multiple of 8 (output sublane alignment)"

    num_classes = params["fc_w"].shape[0]
    cin0 = 16                      # stem input channels zero-padded 3 -> 16 (bf16 tile aligned)

    # resolutions touched by the network (a new entry per stride-2 transition).
    res = [(h, w)]
    for blk in params["blocks"]:
        if blk["stride"] == 2:
            ph, pw = res[-1]
            res.append((ph // 2, pw // 2))
    n_res = len(res)
    ms = [nb * rh * rw for rh, rw in res]
    for m in ms:
        assert m % LANE == 0, "per-block lane extent must be a multiple of 128 (no lane padding)"

    mask_arrays = [_make_tap_masks(nb, rh, rw) for rh, rw in res]
    dec_arrays = [_make_decimation(nb, res[r][0], res[r][1]).astype(jnp.bfloat16)
                  for r in range(n_res - 1)]
    pool_t = _make_pool_t(nb, res[-1][0], res[-1][1])

    # static lane-roll amounts per resolution and tap.
    shifts = []
    for (rh, rw), m in zip(res, ms):
        shifts.append({t: (roll_sign * ((t // 3 - 1) * rw + (t % 3 - 1))) % m for t in range(9)})

    block_meta = [(blk["stride"], "wd" in blk) for blk in params["blocks"]]

    # constant operands (order must match the unpacking inside the kernel).
    operands = []
    operands += mask_arrays
    operands += dec_arrays
    operands += [pool_t, params["fc_w"], params["fc_b"].reshape(1, num_classes)]
    operands += [_stack_taps(params["stem"]["w"], cin_pad=cin0),
                 params["stem"]["b"].reshape(-1, 1)]
    max_rows = 9 * cin0
    for blk in params["blocks"]:
        max_rows = max(max_rows, 9 * blk["w1"].shape[2], 9 * blk["w2"].shape[2])
        operands += [_stack_taps(blk["w1"]), blk["b1"].reshape(-1, 1),
                     _stack_taps(blk["w2"]), blk["b2"].reshape(-1, 1)]
        if "wd" in blk:
            operands += [jnp.transpose(blk["wd"][0, 0], (1, 0)).astype(jnp.bfloat16),
                         blk["bd"].reshape(-1, 1)]

    m_blk = ms[0]
    m_total = n * h * w

    def kernel(*refs):
        xcat_ref = refs[-1]              # (max_rows, m_blk) bf16 scratch: tap-stacked conv input
        out_ref = refs[-2]               # (nb, num_classes)
        it = iter(refs[:-2])

        def take():
            return next(it)

        x_ref = take()
        mask_refs = [take() for _ in range(n_res)]
        dec_refs = [take() for _ in range(n_res - 1)]
        pool_ref, fcw_ref, fcb_ref = take(), take(), take()

        def conv3x3(x, w_ref, b_ref, r, relu=True, residual=None):
            # x: (cin, m) f32 value; w_ref: (cout, 9*cin) bf16; b_ref: (cout, 1) f32.
            cin, m = x.shape
            mref = mask_refs[r]
            # 8 off-center taps: lane roll (XLU) + zero-padding mask, stored bf16 into the slab.
            for j, t in enumerate(NON_CENTER_TAPS):
                sh = shifts[r][t]
                xt = pltpu.roll(x, sh, axis=1) if sh != 0 else x
                xcat_ref[t * cin:(t + 1) * cin, 0:m] = (xt * mref[j]).astype(jnp.bfloat16)
            # center tap: shift 0 and its mask is all ones (no lane padding) -> store directly.
            xcat_ref[4 * cin:5 * cin, 0:m] = x.astype(jnp.bfloat16)
            # one MXU matmul per conv, K = 9*cin, f32 accumulation.
            acc = jnp.dot(w_ref[...], xcat_ref[0:9 * cin, 0:m],
                          preferred_element_type=jnp.float32)
            acc = acc + b_ref[...]                                 # folded BN bias
            if residual is not None:
                acc = acc + residual
            return jnp.maximum(acc, 0.0) if relu else acc

        def decimate(x, dec_ref):
            # 0/1 selection matmul: picks the even (stride-2) positions of every image.
            return jnp.dot(x.astype(jnp.bfloat16), dec_ref[...],
                           preferred_element_type=jnp.float32)

        # stem: conv3x3(3 -> 16) + BN + ReLU  (input channels zero-padded to 16)
        sw, sb = take(), take()
        x = conv3x3(x_ref[...], sw, sb, 0)

        r = 0
        for stride, has_down in block_meta:
            w1, b1, w2, b2 = take(), take(), take(), take()
            if has_down:
                wd, bd = take(), take()
            if stride == 2:
                x_dec = decimate(x, dec_refs[r])
                if has_down:   # downsample = conv1x1(stride 2) + BN on the block input
                    residual = jnp.dot(wd[...], x_dec.astype(jnp.bfloat16),
                                       preferred_element_type=jnp.float32) + bd[...]
                else:
                    residual = x_dec
                y = conv3x3(x, w1, b1, r)                 # full resolution
                y = decimate(y, dec_refs[r])              # stride-2 selection
                r += 1
                x = conv3x3(y, w2, b2, r, residual=residual)
            else:
                if has_down:
                    residual = jnp.dot(wd[...], x.astype(jnp.bfloat16),
                                       preferred_element_type=jnp.float32) + bd[...]
                else:
                    residual = x
                y = conv3x3(x, w1, b1, r)
                x = conv3x3(y, w2, b2, r, residual=residual)

        # AdaptiveAvgPool2d(1) + Linear, fused, kept in f32 (tiny).
        pooled = jax.lax.dot_general(pool_ref[...], x, (((1,), (1,)), ((), ())),
                                     preferred_element_type=jnp.float32)        # (nb, 64)
        out_ref[...] = jax.lax.dot_general(pooled, fcw_ref[...], (((1,), (1,)), ((), ())),
                                           preferred_element_type=jnp.float32) + fcb_ref[...]

    def const_spec(shape):
        rank = len(shape)
        return pl.BlockSpec(shape, lambda i, _r=rank: (0,) * _r)   # resident across the grid

    in_specs = [pl.BlockSpec((cin0, m_blk), lambda i: (0, i))]     # batch-blocked input
    in_specs += [const_spec(tuple(op.shape)) for op in operands]

    pallas_fn = pl.pallas_call(
        kernel,
        out_shape=jax.ShapeDtypeStruct((n, num_classes), jnp.float32),
        grid=(n // nb,),
        in_specs=in_specs,
        out_specs=pl.BlockSpec((nb, num_classes), lambda i: (i, 0)),
        scratch_shapes=[pltpu.VMEM((max_rows, m_blk), jnp.bfloat16)],
        compiler_params=pltpu.CompilerParams(dimension_semantics=("parallel",)),
    )

    def forward(x_nchw):
        # NCHW -> channels-major (C, N*H*W) lane-dense layout; pad stem channels 3 -> 16.
        xc = jnp.transpose(x_nchw.astype(jnp.float32), (1, 0, 2, 3)).reshape(3, m_total)
        xc = jnp.pad(xc, ((0, cin0 - 3), (0, 0)))
        return pallas_fn(xc, *operands)

    return forward


# -------------------------------- pure-XLA reference --------------------------------- #
# bf16-matched reference: every conv uses bf16 weights/activations with f32 accumulation, f32
# activations between layers (same numerics as the kernel) so the comparison can be tight.

def reference_forward(params, x_nchw):
    f32 = jnp.float32
    x = jnp.transpose(x_nchw.astype(f32), (0, 2, 3, 1))   # NHWC

    def conv(x, w_hwio, b, stride):
        pad = (w_hwio.shape[0] - 1) // 2
        y = jax.lax.conv_general_dilated(
            x.astype(jnp.bfloat16), w_hwio.astype(jnp.bfloat16),
            (stride, stride), ((pad, pad), (pad, pad)),
            dimension_numbers=("NHWC", "HWIO", "NHWC"),
            preferred_element_type=f32)
        return y + b

    x = jax.nn.relu(conv(x, params["stem"]["w"], params["stem"]["b"], 1))
    for blk in params["blocks"]:
        s = blk["stride"]
        residual = conv(x, blk["wd"], blk["bd"], s) if "wd" in blk else x
        y = jax.nn.relu(conv(x, blk["w1"], blk["b1"], s))
        y = conv(y, blk["w2"], blk["b2"], 1)
        x = jax.nn.relu(y + residual)
    pooled = jnp.mean(x, axis=(1, 2))
    return jnp.dot(pooled, params["fc_w"].T) + params["fc_b"]


if __name__ == "__main__":
    key = jax.random.PRNGKey(0)
    pkey, xkey = jax.random.split(key)
    params = init_params(pkey, n_size=1, num_classes=10)

    # small CIFAR-like input, NCHW as the PyTorch module expects; 16 images = 2 grid steps of 8.
    N, C, H, W = 16, 3, 16, 16
    x = jax.random.normal(xkey, (N, C, H, W), jnp.float32)

    roll_sign = _roll_shift_sign()
    fwd = jax.jit(build_forward(params, N, H, W, roll_sign, nb=8))

    logits = fwd(x)
    jax.block_until_ready(logits)
    assert logits.shape == (N, 10) and logits.dtype == jnp.float32

    # Check against a bf16-matched XLA reference of the same BN-folded network.  The only
    # differences left are f32 accumulation order and occasional bf16 rounding-boundary flips,
    # so a tight tolerance still catches any layout / shift / mask / weight-packing bug.
    ref = reference_forward(params, x)
    scale = max(1.0, float(jnp.max(jnp.abs(ref))))
    max_err = float(jnp.max(jnp.abs(logits - ref)))
    assert max_err < 2e-2 * scale, f"kernel/reference mismatch: max_abs_err={max_err}"

    print("KERNEL_OK")
</pallas_src>

<mosaic_0001>
module attributes {stable_mosaic.version = 11 : i64} {
  func.func @probe(%arg0: memref<8x128xf32, #tpu.memory_space<vmem>>, %arg1: memref<8x128xf32, #tpu.memory_space<vmem>>) attributes {dimension_semantics = [], scalar_prefetch = 0 : i64, scratch_operands = 0 : i64, tpu.core_type = #tpu.core_type<tc>} {
    %c0 = arith.constant 0 : index
    %c0_0 = arith.constant 0 : index
    %0 = vector.load %arg0[%c0, %c0_0] : memref<8x128xf32, #tpu.memory_space<vmem>>, vector<8x128xf32>
    %c1_i32 = arith.constant 1 : i32
    %1 = tpu.dynamic_rotate %0 by %c1_i32 dim 1 : vector<8x128xf32>, i32 -> vector<8x128xf32>
    %c0_1 = arith.constant 0 : index
    %c0_2 = arith.constant 0 : index
    %2 = vector.load %arg1[%c0_1, %c0_2] : memref<8x128xf32, #tpu.memory_space<vmem>>, vector<8x128xf32>
    tpu.vector_store %arg1[%c0_1, %c0_2], %1 {strides = array<i32>} : memref<8x128xf32, #tpu.memory_space<vmem>>, vector<8x128xf32>,
    return
  }
}

</mosaic_0001>

<llo_original>
// kernel: tpu_custom_call.1
$region0: #{tpu_custom_call.1}
  #allocation0 [shape = 'u32[]', space=smem, size = 0x4, offset = 0x4, fixed_abs, tag = 'smem constant byte address 0x4 - core index']
  #allocation1 [shape = 'u32[144,128]{1,0:T(1,128)}', space=vmem, size = 0x12000, scoped, tag = 'internal scratch']
  %s0 = inlined_call_operand.hbm [shape: f32[8,128], index: 0, kind: input, shape index: {}]
  %s1 = inlined_call_operand.hbm [shape: f32[8,128], index: 1, kind: output, shape index: {}]
  %s2 = sld [smem:[#allocation0]]
  $region18: #{tpu_custom_call.1} parent=0
    _
  %s4 = ssub.s32 1, %s2
  %s5 = scalar_select 0, %s4, %s2
  $region1: #{tpu_custom_call.1} parent=0
    #allocation2 [shape = 'u8[4096]{0}', space=vmem, size = 0x1000, scoped, tag = 'input window, operand 0, single buffered']
    #allocation3 [shape = 's32[1]{0}', space=sflag, size = 0x4, scoped, tag = 'scoped memory for tpu_custom_call.1']
    #allocation4 [shape = 's32[1]{0}', space=sflag, size = 0x4, scoped, tag = 'scoped memory for tpu_custom_call.1']
    #allocation5 [shape = 'u8[4096]{0}', space=vmem, size = 0x1000, scoped, tag = 'output window, operand 0, single buffered']
    %6 = vsyncpa [#allocation3], 0
    %7 = vsyncpa [#allocation4], 0
    // Predicated region
    $region2: #{tpu_custom_call.1} parent=1 // pred_check
      _
    $region3: #{tpu_custom_call.1} parent=1 // pred_check_branch
      %9 = sbr.rel (0) target = $region5
    $region4: #{tpu_custom_call.1} parent=1 // pred_region
      %s11 = ssub.s32 128, 128
      %12 = vsyncadd [#allocation3], %s11
      %s14 = sshll.u32 [#allocation2], 4
      %s15 = int_to_ptr.vmem [resolvable:$true] %s14
      %17 = dma.hbm_to_vmem [thread:$0]  %s0, 128, %s15, [#allocation3]
    $region5: #{tpu_custom_call.1} parent=1 // pred_fallthru
      _
    // Predicated region
    $region6: #{tpu_custom_call.1} parent=1 // pred_check
      _
    $region7: #{tpu_custom_call.1} parent=1 // pred_check_branch
      %19 = sbr.rel (0) target = $region9
    $region8: #{tpu_custom_call.1} parent=1 // pred_region
      %20 = dma.done [#allocation3], 128
    $region9: #{tpu_custom_call.1} parent=1 // pred_fallthru
      _
    %v21 = vld [vmem:[#allocation2] sm:$0xff]
    %22 = vrot.lane.b32.xlu0 %v21, 1
    %v23 = vpop.permute.xlu0 %22
    %24 = vst [vmem:[#allocation5] sm:$0xff] %v23
    // Predicated region
    $region10: #{tpu_custom_call.1} parent=1 // pred_check
      _
    $region11: #{tpu_custom_call.1} parent=1 // pred_check_branch
      %26 = sbr.rel (0) target = $region13
    $region12: #{tpu_custom_call.1} parent=1 // pred_region
      %s28 = ssub.s32 128, 128
      %29 = vsyncadd [#allocation4], %s28
      %s31 = sshll.u32 [#allocation5], 4
      %s32 = int_to_ptr.vmem [resolvable:$true] %s31
      %34 = dma.vmem_to_hbm [thread:$0]  %s32, 128, %s1, [#allocation4]
    $region13: #{tpu_custom_call.1} parent=1 // pred_fallthru
      _
    // Predicated region
    $region14: #{tpu_custom_call.1} parent=1 // pred_check
      _
    $region15: #{tpu_custom_call.1} parent=1 // pred_check_branch
      %36 = sbr.rel (0) target = $region17
    $region16: #{tpu_custom_call.1} parent=1 // pred_region
      %37 = dma.done [#allocation4], 128
    $region17: #{tpu_custom_call.1} parent=1 // pred_fallthru
      _
    %38 = vsyncpa [#allocation3], 1
    %39 = vsyncpa [#allocation4], 1

</llo_original>
